<compile_context>
chip_gen: v6e
topology: v6e:2x2x1
jax: 0.10.0
libtpu: 0.0.40
codegen_flags: <defaults>
</compile_context>

<pallas_src>
import jax
import jax.numpy as jnp
from jax import lax
from jax.experimental import pallas as pl
from jax.experimental.pallas import tpu as pltpu


def conv1x1_diff_pad_kernel(w_ref, x1_ref, x2_ref, o_ref):
    # w_ref : (Cout, Cin)            SMEM, f32
    # x1_ref: (N, Cin, H, W)         VMEM
    # x2_ref: (N, Cin, H, W)         VMEM
    # o_ref : (N, Cout, H+2p, W+2p)  VMEM, padded output (zero border)
    n, cin, h, w = x1_ref.shape
    cout = o_ref.shape[1]
    ph = (o_ref.shape[2] - h) // 2
    pw = (o_ref.shape[3] - w) // 2

    # Bias cancels in conv(x1) - conv(x2); compute in f32.
    d = x1_ref[...].astype(jnp.float32) - x2_ref[...].astype(jnp.float32)

    # Zero border written once; interior overwritten below.
    o_ref[...] = jnp.zeros_like(o_ref)

    # y[n, o, :, :] = sum_k w[o, k] * d[n, k, :, :]
    # Scalar-splat FMAs: w[o, k] is a cheap SMEM scalar read; d[:, k] slices
    # whole vreg slabs along a major dim (no cross-lane traffic).
    for o in range(cout):
        acc = w_ref[o, 0] * d[:, 0]
        for k in range(1, cin):
            acc = acc + w_ref[o, k] * d[:, k]
        o_ref[:, o, ph:ph + h, pw:pw + w] = acc.astype(o_ref.dtype)


def model_forward(x2_nchw, x1_nchw, weight, bias):
    """Equivalent of Model.forward(x2, x1) = conv(x1) - conv(x2).

    weight: (Cout, Cin, 1, 1) torch Conv2d layout, bias: (Cout,).
    The bias is accepted for interface parity but cancels exactly in the
    difference, so it never enters the kernel.
    """
    del bias  # cancels exactly in conv(x1) - conv(x2)
    n, cin, h, w = x1_nchw.shape
    cout = weight.shape[0]
    pad = 1
    hp, wp = h + 2 * pad, w + 2 * pad
    out_dtype = x1_nchw.dtype

    w2d = weight.reshape(cout, cin).astype(jnp.float32)

    return pl.pallas_call(
        conv1x1_diff_pad_kernel,
        out_shape=jax.ShapeDtypeStruct((n, cout, hp, wp), out_dtype),
        grid=(1,),
        in_specs=[
            pl.BlockSpec(memory_space=pltpu.MemorySpace.SMEM),       # weight
            pl.BlockSpec((n, cin, h, w), lambda i: (0, 0, 0, 0)),    # x1
            pl.BlockSpec((n, cin, h, w), lambda i: (0, 0, 0, 0)),    # x2
        ],
        out_specs=pl.BlockSpec((n, cout, hp, wp), lambda i: (0, 0, 0, 0)),
    )(w2d, x1_nchw, x2_nchw)


def reference_forward(x2_nchw, x1_nchw, weight, bias):
    """Plain-JAX reference matching torch semantics (sanity check)."""
    def conv(x):
        y = lax.conv_general_dilated(
            x, weight, window_strides=(1, 1), padding=((1, 1), (1, 1)),
            dimension_numbers=("NCHW", "OIHW", "NCHW"))
        return y + bias.reshape(1, -1, 1, 1)
    return conv(x1_nchw) - conv(x2_nchw)


if __name__ == "__main__":
    key = jax.random.PRNGKey(0)
    k1, k2, kw, kb = jax.random.split(key, 4)

    # Small shapes consistent with Conv2d(3, 8, 1, stride=1, padding=1).
    N, Cin, H, W = 2, 3, 16, 16
    Cout = 8

    x1 = jax.random.normal(k1, (N, Cin, H, W), dtype=jnp.float32)
    x2 = jax.random.normal(k2, (N, Cin, H, W), dtype=jnp.float32)

    # Deterministic synthetic Conv2d(3, 8, 1) parameters.
    weight = jax.random.normal(kw, (Cout, Cin, 1, 1), dtype=jnp.float32) * 0.1
    bias = jax.random.normal(kb, (Cout,), dtype=jnp.float32) * 0.1

    out = model_forward(x2, x1, weight, bias)
    out = jax.block_until_ready(out)

    ref = reference_forward(x2, x1, weight, bias)
    assert out.shape == (N, Cout, H + 2, W + 2), out.shape
    assert jnp.allclose(out, ref, atol=1e-5, rtol=1e-5), "mismatch vs reference"

    print("KERNEL_OK")
</pallas_src>

<mosaic_0001>
module attributes {stable_mosaic.version = 11 : i64} {
  func.func @conv1x1_diff_pad_kernel(%arg0: i32, %arg1: memref<8x3xf32, #tpu.memory_space<smem>>, %arg2: memref<2x3x16x16xf32, #tpu.memory_space<vmem>>, %arg3: memref<2x3x16x16xf32, #tpu.memory_space<vmem>>, %arg4: memref<2x8x18x18xf32, #tpu.memory_space<vmem>>) attributes {dimension_semantics = [#tpu.dimension_semantics<arbitrary>], iteration_bounds = array<i64: 1>, scalar_prefetch = 0 : i64, scratch_operands = 0 : i64, tpu.core_type = #tpu.core_type<tc>, window_params = [{transform_indices = @transform_0, window_bounds = array<i64: 8, 3>}, {pipeline_mode = #tpu.pipeline_mode<synchronous>, transform_indices = @transform_1, window_bounds = array<i64: 2, 3, 16, 16>}, {pipeline_mode = #tpu.pipeline_mode<synchronous>, transform_indices = @transform_2, window_bounds = array<i64: 2, 3, 16, 16>}, {pipeline_mode = #tpu.pipeline_mode<synchronous>, transform_indices = @transform_3, window_bounds = array<i64: 2, 8, 18, 18>}]} {
    %c0 = arith.constant 0 : index
    %c0_0 = arith.constant 0 : index
    %c0_1 = arith.constant 0 : index
    %c0_2 = arith.constant 0 : index
    %0 = vector.load %arg2[%c0, %c0_0, %c0_1, %c0_2] : memref<2x3x16x16xf32, #tpu.memory_space<vmem>>, vector<2x3x16x16xf32>
    %c0_3 = arith.constant 0 : index
    %c0_4 = arith.constant 0 : index
    %c0_5 = arith.constant 0 : index
    %c0_6 = arith.constant 0 : index
    %1 = vector.load %arg3[%c0_3, %c0_4, %c0_5, %c0_6] : memref<2x3x16x16xf32, #tpu.memory_space<vmem>>, vector<2x3x16x16xf32>
    %2 = arith.subf %0, %1 : vector<2x3x16x16xf32>
    %cst = arith.constant 0.000000e+00 : f32
    %3 = vector.broadcast %cst : f32 to vector<2x8x18x18xf32>
    %c0_7 = arith.constant 0 : index
    %c0_8 = arith.constant 0 : index
    %c0_9 = arith.constant 0 : index
    %c0_10 = arith.constant 0 : index
    %4 = vector.load %arg4[%c0_7, %c0_8, %c0_9, %c0_10] : memref<2x8x18x18xf32, #tpu.memory_space<vmem>>, vector<2x8x18x18xf32>
    tpu.vector_store %arg4[%c0_7, %c0_8, %c0_9, %c0_10], %3 {strides = array<i32>} : memref<2x8x18x18xf32, #tpu.memory_space<vmem>>, vector<2x8x18x18xf32>,
    %c0_11 = arith.constant 0 : index
    %c0_12 = arith.constant 0 : index
    %5 = memref.load %arg1[%c0_11, %c0_12] : memref<8x3xf32, #tpu.memory_space<smem>>
    %6 = vector.extract_strided_slice %2 {offsets = [0, 0, 0, 0], sizes = [2, 1, 16, 16], strides = [1, 1, 1, 1]} : vector<2x3x16x16xf32> to vector<2x1x16x16xf32>
    %7 = vector.shape_cast %6 : vector<2x1x16x16xf32> to vector<2x16x16xf32>
    %8 = vector.broadcast %5 : f32 to vector<2x16x16xf32>
    %9 = arith.mulf %8, %7 : vector<2x16x16xf32>
    %c0_13 = arith.constant 0 : index
    %c1 = arith.constant 1 : index
    %10 = memref.load %arg1[%c0_13, %c1] : memref<8x3xf32, #tpu.memory_space<smem>>
    %11 = vector.extract_strided_slice %2 {offsets = [0, 1, 0, 0], sizes = [2, 1, 16, 16], strides = [1, 1, 1, 1]} : vector<2x3x16x16xf32> to vector<2x1x16x16xf32>
    %12 = vector.shape_cast %11 : vector<2x1x16x16xf32> to vector<2x16x16xf32>
    %13 = vector.broadcast %10 : f32 to vector<2x16x16xf32>
    %14 = arith.mulf %13, %12 : vector<2x16x16xf32>
    %15 = arith.addf %9, %14 : vector<2x16x16xf32>
    %c0_14 = arith.constant 0 : index
    %c2 = arith.constant 2 : index
    %16 = memref.load %arg1[%c0_14, %c2] : memref<8x3xf32, #tpu.memory_space<smem>>
    %17 = vector.extract_strided_slice %2 {offsets = [0, 2, 0, 0], sizes = [2, 1, 16, 16], strides = [1, 1, 1, 1]} : vector<2x3x16x16xf32> to vector<2x1x16x16xf32>
    %18 = vector.shape_cast %17 : vector<2x1x16x16xf32> to vector<2x16x16xf32>
    %19 = vector.broadcast %16 : f32 to vector<2x16x16xf32>
    %20 = arith.mulf %19, %18 : vector<2x16x16xf32>
    %21 = arith.addf %15, %20 : vector<2x16x16xf32>
    %c0_15 = arith.constant 0 : index
    %c0_16 = arith.constant 0 : index
    %c1_17 = arith.constant 1 : index
    %c1_18 = arith.constant 1 : index
    %22 = vector.load %arg4[%c0_15, %c0_16, %c1_17, %c1_18] : memref<2x8x18x18xf32, #tpu.memory_space<vmem>>, vector<2x1x16x16xf32>
    %23 = vector.shape_cast %22 : vector<2x1x16x16xf32> to vector<2x16x16xf32>
    %24 = vector.shape_cast %21 : vector<2x16x16xf32> to vector<2x1x16x16xf32>
    tpu.vector_store %arg4[%c0_15, %c0_16, %c1_17, %c1_18], %24 {strides = array<i32>} : memref<2x8x18x18xf32, #tpu.memory_space<vmem>>, vector<2x1x16x16xf32>,
    %c1_19 = arith.constant 1 : index
    %c0_20 = arith.constant 0 : index
    %25 = memref.load %arg1[%c1_19, %c0_20] : memref<8x3xf32, #tpu.memory_space<smem>>
    %26 = vector.extract_strided_slice %2 {offsets = [0, 0, 0, 0], sizes = [2, 1, 16, 16], strides = [1, 1, 1, 1]} : vector<2x3x16x16xf32> to vector<2x1x16x16xf32>
    %27 = vector.shape_cast %26 : vector<2x1x16x16xf32> to vector<2x16x16xf32>
    %28 = vector.broadcast %25 : f32 to vector<2x16x16xf32>
    %29 = arith.mulf %28, %27 : vector<2x16x16xf32>
    %c1_21 = arith.constant 1 : index
    %c1_22 = arith.constant 1 : index
    %30 = memref.load %arg1[%c1_21, %c1_22] : memref<8x3xf32, #tpu.memory_space<smem>>
    %31 = vector.extract_strided_slice %2 {offsets = [0, 1, 0, 0], sizes = [2, 1, 16, 16], strides = [1, 1, 1, 1]} : vector<2x3x16x16xf32> to vector<2x1x16x16xf32>
    %32 = vector.shape_cast %31 : vector<2x1x16x16xf32> to vector<2x16x16xf32>
    %33 = vector.broadcast %30 : f32 to vector<2x16x16xf32>
    %34 = arith.mulf %33, %32 : vector<2x16x16xf32>
    %35 = arith.addf %29, %34 : vector<2x16x16xf32>
    %c1_23 = arith.constant 1 : index
    %c2_24 = arith.constant 2 : index
    %36 = memref.load %arg1[%c1_23, %c2_24] : memref<8x3xf32, #tpu.memory_space<smem>>
    %37 = vector.extract_strided_slice %2 {offsets = [0, 2, 0, 0], sizes = [2, 1, 16, 16], strides = [1, 1, 1, 1]} : vector<2x3x16x16xf32> to vector<2x1x16x16xf32>
    %38 = vector.shape_cast %37 : vector<2x1x16x16xf32> to vector<2x16x16xf32>
    %39 = vector.broadcast %36 : f32 to vector<2x16x16xf32>
    %40 = arith.mulf %39, %38 : vector<2x16x16xf32>
    %41 = arith.addf %35, %40 : vector<2x16x16xf32>
    %c0_25 = arith.constant 0 : index
    %c1_26 = arith.constant 1 : index
    %c1_27 = arith.constant 1 : index
    %c1_28 = arith.constant 1 : index
    %42 = vector.load %arg4[%c0_25, %c1_26, %c1_27, %c1_28] : memref<2x8x18x18xf32, #tpu.memory_space<vmem>>, vector<2x1x16x16xf32>
    %43 = vector.shape_cast %42 : vector<2x1x16x16xf32> to vector<2x16x16xf32>
    %44 = vector.shape_cast %41 : vector<2x16x16xf32> to vector<2x1x16x16xf32>
    tpu.vector_store %arg4[%c0_25, %c1_26, %c1_27, %c1_28], %44 {strides = array<i32>} : memref<2x8x18x18xf32, #tpu.memory_space<vmem>>, vector<2x1x16x16xf32>,
    %c2_29 = arith.constant 2 : index
    %c0_30 = arith.constant 0 : index
    %45 = memref.load %arg1[%c2_29, %c0_30] : memref<8x3xf32, #tpu.memory_space<smem>>
    %46 = vector.extract_strided_slice %2 {offsets = [0, 0, 0, 0], sizes = [2, 1, 16, 16], strides = [1, 1, 1, 1]} : vector<2x3x16x16xf32> to vector<2x1x16x16xf32>
    %47 = vector.shape_cast %46 : vector<2x1x16x16xf32> to vector<2x16x16xf32>
    %48 = vector.broadcast %45 : f32 to vector<2x16x16xf32>
    %49 = arith.mulf %48, %47 : vector<2x16x16xf32>
    %c2_31 = arith.constant 2 : index
    %c1_32 = arith.constant 1 : index
    %50 = memref.load %arg1[%c2_31, %c1_32] : memref<8x3xf32, #tpu.memory_space<smem>>
    %51 = vector.extract_strided_slice %2 {offsets = [0, 1, 0, 0], sizes = [2, 1, 16, 16], strides = [1, 1, 1, 1]} : vector<2x3x16x16xf32> to vector<2x1x16x16xf32>
    %52 = vector.shape_cast %51 : vector<2x1x16x16xf32> to vector<2x16x16xf32>
    %53 = vector.broadcast %50 : f32 to vector<2x16x16xf32>
    %54 = arith.mulf %53, %52 : vector<2x16x16xf32>
    %55 = arith.addf %49, %54 : vector<2x16x16xf32>
    %c2_33 = arith.constant 2 : index
    %c2_34 = arith.constant 2 : index
    %56 = memref.load %arg1[%c2_33, %c2_34] : memref<8x3xf32, #tpu.memory_space<smem>>
    %57 = vector.extract_strided_slice %2 {offsets = [0, 2, 0, 0], sizes = [2, 1, 16, 16], strides = [1, 1, 1, 1]} : vector<2x3x16x16xf32> to vector<2x1x16x16xf32>
    %58 = vector.shape_cast %57 : vector<2x1x16x16xf32> to vector<2x16x16xf32>
    %59 = vector.broadcast %56 : f32 to vector<2x16x16xf32>
    %60 = arith.mulf %59, %58 : vector<2x16x16xf32>
    %61 = arith.addf %55, %60 : vector<2x16x16xf32>
    %c0_35 = arith.constant 0 : index
    %c2_36 = arith.constant 2 : index
    %c1_37 = arith.constant 1 : index
    %c1_38 = arith.constant 1 : index
    %62 = vector.load %arg4[%c0_35, %c2_36, %c1_37, %c1_38] : memref<2x8x18x18xf32, #tpu.memory_space<vmem>>, vector<2x1x16x16xf32>
    %63 = vector.shape_cast %62 : vector<2x1x16x16xf32> to vector<2x16x16xf32>
    %64 = vector.shape_cast %61 : vector<2x16x16xf32> to vector<2x1x16x16xf32>
    tpu.vector_store %arg4[%c0_35, %c2_36, %c1_37, %c1_38], %64 {strides = array<i32>} : memref<2x8x18x18xf32, #tpu.memory_space<vmem>>, vector<2x1x16x16xf32>,
    %c3 = arith.constant 3 : index
    %c0_39 = arith.constant 0 : index
    %65 = memref.load %arg1[%c3, %c0_39] : memref<8x3xf32, #tpu.memory_space<smem>>
    %66 = vector.extract_strided_slice %2 {offsets = [0, 0, 0, 0], sizes = [2, 1, 16, 16], strides = [1, 1, 1, 1]} : vector<2x3x16x16xf32> to vector<2x1x16x16xf32>
    %67 = vector.shape_cast %66 : vector<2x1x16x16xf32> to vector<2x16x16xf32>
    %68 = vector.broadcast %65 : f32 to vector<2x16x16xf32>
    %69 = arith.mulf %68, %67 : vector<2x16x16xf32>
    %c3_40 = arith.constant 3 : index
    %c1_41 = arith.constant 1 : index
    %70 = memref.load %arg1[%c3_40, %c1_41] : memref<8x3xf32, #tpu.memory_space<smem>>
    %71 = vector.extract_strided_slice %2 {offsets = [0, 1, 0, 0], sizes = [2, 1, 16, 16], strides = [1, 1, 1, 1]} : vector<2x3x16x16xf32> to vector<2x1x16x16xf32>
    %72 = vector.shape_cast %71 : vector<2x1x16x16xf32> to vector<2x16x16xf32>
    %73 = vector.broadcast %70 : f32 to vector<2x16x16xf32>
    %74 = arith.mulf %73, %72 : vector<2x16x16xf32>
    %75 = arith.addf %69, %74 : vector<2x16x16xf32>
    %c3_42 = arith.constant 3 : index
    %c2_43 = arith.constant 2 : index
    %76 = memref.load %arg1[%c3_42, %c2_43] : memref<8x3xf32, #tpu.memory_space<smem>>
    %77 = vector.extract_strided_slice %2 {offsets = [0, 2, 0, 0], sizes = [2, 1, 16, 16], strides = [1, 1, 1, 1]} : vector<2x3x16x16xf32> to vector<2x1x16x16xf32>
    %78 = vector.shape_cast %77 : vector<2x1x16x16xf32> to vector<2x16x16xf32>
    %79 = vector.broadcast %76 : f32 to vector<2x16x16xf32>
    %80 = arith.mulf %79, %78 : vector<2x16x16xf32>
    %81 = arith.addf %75, %80 : vector<2x16x16xf32>
    %c0_44 = arith.constant 0 : index
    %c3_45 = arith.constant 3 : index
    %c1_46 = arith.constant 1 : index
    %c1_47 = arith.constant 1 : index
    %82 = vector.load %arg4[%c0_44, %c3_45, %c1_46, %c1_47] : memref<2x8x18x18xf32, #tpu.memory_space<vmem>>, vector<2x1x16x16xf32>
    %83 = vector.shape_cast %82 : vector<2x1x16x16xf32> to vector<2x16x16xf32>
    %84 = vector.shape_cast %81 : vector<2x16x16xf32> to vector<2x1x16x16xf32>
    tpu.vector_store %arg4[%c0_44, %c3_45, %c1_46, %c1_47], %84 {strides = array<i32>} : memref<2x8x18x18xf32, #tpu.memory_space<vmem>>, vector<2x1x16x16xf32>,
    %c4 = arith.constant 4 : index
    %c0_48 = arith.constant 0 : index
    %85 = memref.load %arg1[%c4, %c0_48] : memref<8x3xf32, #tpu.memory_space<smem>>
    %86 = vector.extract_strided_slice %2 {offsets = [0, 0, 0, 0], sizes = [2, 1, 16, 16], strides = [1, 1, 1, 1]} : vector<2x3x16x16xf32> to vector<2x1x16x16xf32>
    %87 = vector.shape_cast %86 : vector<2x1x16x16xf32> to vector<2x16x16xf32>
    %88 = vector.broadcast %85 : f32 to vector<2x16x16xf32>
    %89 = arith.mulf %88, %87 : vector<2x16x16xf32>
    %c4_49 = arith.constant 4 : index
    %c1_50 = arith.constant 1 : index
    %90 = memref.load %arg1[%c4_49, %c1_50] : memref<8x3xf32, #tpu.memory_space<smem>>
    %91 = vector.extract_strided_slice %2 {offsets = [0, 1, 0, 0], sizes = [2, 1, 16, 16], strides = [1, 1, 1, 1]} : vector<2x3x16x16xf32> to vector<2x1x16x16xf32>
    %92 = vector.shape_cast %91 : vector<2x1x16x16xf32> to vector<2x16x16xf32>
    %93 = vector.broadcast %90 : f32 to vector<2x16x16xf32>
    %94 = arith.mulf %93, %92 : vector<2x16x16xf32>
    %95 = arith.addf %89, %94 : vector<2x16x16xf32>
    %c4_51 = arith.constant 4 : index
    %c2_52 = arith.constant 2 : index
    %96 = memref.load %arg1[%c4_51, %c2_52] : memref<8x3xf32, #tpu.memory_space<smem>>
    %97 = vector.extract_strided_slice %2 {offsets = [0, 2, 0, 0], sizes = [2, 1, 16, 16], strides = [1, 1, 1, 1]} : vector<2x3x16x16xf32> to vector<2x1x16x16xf32>
    %98 = vector.shape_cast %97 : vector<2x1x16x16xf32> to vector<2x16x16xf32>
    %99 = vector.broadcast %96 : f32 to vector<2x16x16xf32>
    %100 = arith.mulf %99, %98 : vector<2x16x16xf32>
    %101 = arith.addf %95, %100 : vector<2x16x16xf32>
    %c0_53 = arith.constant 0 : index
    %c4_54 = arith.constant 4 : index
    %c1_55 = arith.constant 1 : index
    %c1_56 = arith.constant 1 : index
    %102 = vector.load %arg4[%c0_53, %c4_54, %c1_55, %c1_56] : memref<2x8x18x18xf32, #tpu.memory_space<vmem>>, vector<2x1x16x16xf32>
    %103 = vector.shape_cast %102 : vector<2x1x16x16xf32> to vector<2x16x16xf32>
    %104 = vector.shape_cast %101 : vector<2x16x16xf32> to vector<2x1x16x16xf32>
    tpu.vector_store %arg4[%c0_53, %c4_54, %c1_55, %c1_56], %104 {strides = array<i32>} : memref<2x8x18x18xf32, #tpu.memory_space<vmem>>, vector<2x1x16x16xf32>,
    %c5 = arith.constant 5 : index
    %c0_57 = arith.constant 0 : index
    %105 = memref.load %arg1[%c5, %c0_57] : memref<8x3xf32, #tpu.memory_space<smem>>
    %106 = vector.extract_strided_slice %2 {offsets = [0, 0, 0, 0], sizes = [2, 1, 16, 16], strides = [1, 1, 1, 1]} : vector<2x3x16x16xf32> to vector<2x1x16x16xf32>
    %107 = vector.shape_cast %106 : vector<2x1x16x16xf32> to vector<2x16x16xf32>
    %108 = vector.broadcast %105 : f32 to vector<2x16x16xf32>
    %109 = arith.mulf %108, %107 : vector<2x16x16xf32>
    %c5_58 = arith.constant 5 : index
    %c1_59 = arith.constant 1 : index
    %110 = memref.load %arg1[%c5_58, %c1_59] : memref<8x3xf32, #tpu.memory_space<smem>>
    %111 = vector.extract_strided_slice %2 {offsets = [0, 1, 0, 0], sizes = [2, 1, 16, 16], strides = [1, 1, 1, 1]} : vector<2x3x16x16xf32> to vector<2x1x16x16xf32>
    %112 = vector.shape_cast %111 : vector<2x1x16x16xf32> to vector<2x16x16xf32>
    %113 = vector.broadcast %110 : f32 to vector<2x16x16xf32>
    %114 = arith.mulf %113, %112 : vector<2x16x16xf32>
    %115 = arith.addf %109, %114 : vector<2x16x16xf32>
    %c5_60 = arith.constant 5 : index
    %c2_61 = arith.constant 2 : index
    %116 = memref.load %arg1[%c5_60, %c2_61] : memref<8x3xf32, #tpu.memory_space<smem>>
    %117 = vector.extract_strided_slice %2 {offsets = [0, 2, 0, 0], sizes = [2, 1, 16, 16], strides = [1, 1, 1, 1]} : vector<2x3x16x16xf32> to vector<2x1x16x16xf32>
    %118 = vector.shape_cast %117 : vector<2x1x16x16xf32> to vector<2x16x16xf32>
    %119 = vector.broadcast %116 : f32 to vector<2x16x16xf32>
    %120 = arith.mulf %119, %118 : vector<2x16x16xf32>
    %121 = arith.addf %115, %120 : vector<2x16x16xf32>
    %c0_62 = arith.constant 0 : index
    %c5_63 = arith.constant 5 : index
    %c1_64 = arith.constant 1 : index
    %c1_65 = arith.constant 1 : index
    %122 = vector.load %arg4[%c0_62, %c5_63, %c1_64, %c1_65] : memref<2x8x18x18xf32, #tpu.memory_space<vmem>>, vector<2x1x16x16xf32>
    %123 = vector.shape_cast %122 : vector<2x1x16x16xf32> to vector<2x16x16xf32>
    %124 = vector.shape_cast %121 : vector<2x16x16xf32> to vector<2x1x16x16xf32>
    tpu.vector_store %arg4[%c0_62, %c5_63, %c1_64, %c1_65], %124 {strides = array<i32>} : memref<2x8x18x18xf32, #tpu.memory_space<vmem>>, vector<2x1x16x16xf32>,
    %c6 = arith.constant 6 : index
    %c0_66 = arith.constant 0 : index
    %125 = memref.load %arg1[%c6, %c0_66] : memref<8x3xf32, #tpu.memory_space<smem>>
    %126 = vector.extract_strided_slice %2 {offsets = [0, 0, 0, 0], sizes = [2, 1, 16, 16], strides = [1, 1, 1, 1]} : vector<2x3x16x16xf32> to vector<2x1x16x16xf32>
    %127 = vector.shape_cast %126 : vector<2x1x16x16xf32> to vector<2x16x16xf32>
    %128 = vector.broadcast %125 : f32 to vector<2x16x16xf32>
    %129 = arith.mulf %128, %127 : vector<2x16x16xf32>
    %c6_67 = arith.constant 6 : index
    %c1_68 = arith.constant 1 : index
    %130 = memref.load %arg1[%c6_67, %c1_68] : memref<8x3xf32, #tpu.memory_space<smem>>
    %131 = vector.extract_strided_slice %2 {offsets = [0, 1, 0, 0], sizes = [2, 1, 16, 16], strides = [1, 1, 1, 1]} : vector<2x3x16x16xf32> to vector<2x1x16x16xf32>
    %132 = vector.shape_cast %131 : vector<2x1x16x16xf32> to vector<2x16x16xf32>
    %133 = vector.broadcast %130 : f32 to vector<2x16x16xf32>
    %134 = arith.mulf %133, %132 : vector<2x16x16xf32>
    %135 = arith.addf %129, %134 : vector<2x16x16xf32>
    %c6_69 = arith.constant 6 : index
    %c2_70 = arith.constant 2 : index
    %136 = memref.load %arg1[%c6_69, %c2_70] : memref<8x3xf32, #tpu.memory_space<smem>>
    %137 = vector.extract_strided_slice %2 {offsets = [0, 2, 0, 0], sizes = [2, 1, 16, 16], strides = [1, 1, 1, 1]} : vector<2x3x16x16xf32> to vector<2x1x16x16xf32>
    %138 = vector.shape_cast %137 : vector<2x1x16x16xf32> to vector<2x16x16xf32>
    %139 = vector.broadcast %136 : f32 to vector<2x16x16xf32>
    %140 = arith.mulf %139, %138 : vector<2x16x16xf32>
    %141 = arith.addf %135, %140 : vector<2x16x16xf32>
    %c0_71 = arith.constant 0 : index
    %c6_72 = arith.constant 6 : index
    %c1_73 = arith.constant 1 : index
    %c1_74 = arith.constant 1 : index
    %142 = vector.load %arg4[%c0_71, %c6_72, %c1_73, %c1_74] : memref<2x8x18x18xf32, #tpu.memory_space<vmem>>, vector<2x1x16x16xf32>
    %143 = vector.shape_cast %142 : vector<2x1x16x16xf32> to vector<2x16x16xf32>
    %144 = vector.shape_cast %141 : vector<2x16x16xf32> to vector<2x1x16x16xf32>
    tpu.vector_store %arg4[%c0_71, %c6_72, %c1_73, %c1_74], %144 {strides = array<i32>} : memref<2x8x18x18xf32, #tpu.memory_space<vmem>>, vector<2x1x16x16xf32>,
    %c7 = arith.constant 7 : index
    %c0_75 = arith.constant 0 : index
    %145 = memref.load %arg1[%c7, %c0_75] : memref<8x3xf32, #tpu.memory_space<smem>>
    %146 = vector.extract_strided_slice %2 {offsets = [0, 0, 0, 0], sizes = [2, 1, 16, 16], strides = [1, 1, 1, 1]} : vector<2x3x16x16xf32> to vector<2x1x16x16xf32>
    %147 = vector.shape_cast %146 : vector<2x1x16x16xf32> to vector<2x16x16xf32>
    %148 = vector.broadcast %145 : f32 to vector<2x16x16xf32>
    %149 = arith.mulf %148, %147 : vector<2x16x16xf32>
    %c7_76 = arith.constant 7 : index
    %c1_77 = arith.constant 1 : index
    %150 = memref.load %arg1[%c7_76, %c1_77] : memref<8x3xf32, #tpu.memory_space<smem>>
    %151 = vector.extract_strided_slice %2 {offsets = [0, 1, 0, 0], sizes = [2, 1, 16, 16], strides = [1, 1, 1, 1]} : vector<2x3x16x16xf32> to vector<2x1x16x16xf32>
    %152 = vector.shape_cast %151 : vector<2x1x16x16xf32> to vector<2x16x16xf32>
    %153 = vector.broadcast %150 : f32 to vector<2x16x16xf32>
    %154 = arith.mulf %153, %152 : vector<2x16x16xf32>
    %155 = arith.addf %149, %154 : vector<2x16x16xf32>
    %c7_78 = arith.constant 7 : index
    %c2_79 = arith.constant 2 : index
    %156 = memref.load %arg1[%c7_78, %c2_79] : memref<8x3xf32, #tpu.memory_space<smem>>
    %157 = vector.extract_strided_slice %2 {offsets = [0, 2, 0, 0], sizes = [2, 1, 16, 16], strides = [1, 1, 1, 1]} : vector<2x3x16x16xf32> to vector<2x1x16x16xf32>
    %158 = vector.shape_cast %157 : vector<2x1x16x16xf32> to vector<2x16x16xf32>
    %159 = vector.broadcast %156 : f32 to vector<2x16x16xf32>
    %160 = arith.mulf %159, %158 : vector<2x16x16xf32>
    %161 = arith.addf %155, %160 : vector<2x16x16xf32>
    %c0_80 = arith.constant 0 : index
    %c7_81 = arith.constant 7 : index
    %c1_82 = arith.constant 1 : index
    %c1_83 = arith.constant 1 : index
    %162 = vector.load %arg4[%c0_80, %c7_81, %c1_82, %c1_83] : memref<2x8x18x18xf32, #tpu.memory_space<vmem>>, vector<2x1x16x16xf32>
    %163 = vector.shape_cast %162 : vector<2x1x16x16xf32> to vector<2x16x16xf32>
    %164 = vector.shape_cast %161 : vector<2x16x16xf32> to vector<2x1x16x16xf32>
    tpu.vector_store %arg4[%c0_80, %c7_81, %c1_82, %c1_83], %164 {strides = array<i32>} : memref<2x8x18x18xf32, #tpu.memory_space<vmem>>, vector<2x1x16x16xf32>,
    return
  }
  func.func @transform_0(%arg0: i32) -> (i32, i32) {
    %c0_i32 = arith.constant 0 : i32
    %c0_i32_0 = arith.constant 0 : i32
    %c0_i32_1 = arith.constant 0 : i32
    return %c0_i32, %c0_i32_0 : i32, i32
  }
  func.func @transform_1(%arg0: i32) -> (i32, i32, i32, i32) {
    %c0_i32 = arith.constant 0 : i32
    %c0_i32_0 = arith.constant 0 : i32
    %c0_i32_1 = arith.constant 0 : i32
    %c0_i32_2 = arith.constant 0 : i32
    %c0_i32_3 = arith.constant 0 : i32
    return %c0_i32, %c0_i32_0, %c0_i32_1, %c0_i32_2 : i32, i32, i32, i32
  }
  func.func @transform_2(%arg0: i32) -> (i32, i32, i32, i32) {
    %c0_i32 = arith.constant 0 : i32
    %c0_i32_0 = arith.constant 0 : i32
    %c0_i32_1 = arith.constant 0 : i32
    %c0_i32_2 = arith.constant 0 : i32
    %c0_i32_3 = arith.constant 0 : i32
    return %c0_i32, %c0_i32_0, %c0_i32_1, %c0_i32_2 : i32, i32, i32, i32
  }
  func.func @transform_3(%arg0: i32) -> (i32, i32, i32, i32) {
    %c0_i32 = arith.constant 0 : i32
    %c0_i32_0 = arith.constant 0 : i32
    %c0_i32_1 = arith.constant 0 : i32
    %c0_i32_2 = arith.constant 0 : i32
    %c0_i32_3 = arith.constant 0 : i32
    return %c0_i32, %c0_i32_0, %c0_i32_1, %c0_i32_2 : i32, i32, i32, i32
  }
}

</mosaic_0001>

<llo_original>
// kernel: tpu_custom_call.1
$region0: #{tpu_custom_call.1}
  #allocation0 [shape = 'u32[]', space=smem, size = 0x4, offset = 0x4, fixed_abs, tag = 'smem constant byte address 0x4 - core index']
  #allocation1 [shape = 'u32[144,128]{1,0:T(1,128)}', space=vmem, size = 0x12000, scoped, tag = 'internal scratch']
  %s0 = inlined_call_operand.vmem [shape: f32[8,3], index: 0, kind: input, shape index: {}]
  %s1 = inlined_call_operand.hbm [shape: f32[2,3,16,16], index: 1, kind: input, shape index: {}]
  %s2 = inlined_call_operand.hbm [shape: f32[2,3,16,16], index: 2, kind: input, shape index: {}]
  %s3 = inlined_call_operand.vmem [shape: f32[2,8,18,18], index: 3, kind: output, shape index: {}]
  %s4 = sld [smem:[#allocation0]]
  $region34: #{tpu_custom_call.1} parent=0
    _
  %s6 = ssub.s32 1, %s4
  %s7 = scalar_select 0, %s6, %s4
  $region1: #{tpu_custom_call.1} parent=0
    #allocation2 [shape = 'u8[4096]{0}', space=smem, size = 0x1000, scoped, tag = 'input window, operand 0, single buffered']
    #allocation3 [shape = 's32[1]{0}', space=sflag, size = 0x4, scoped, tag = 'scoped memory for tpu_custom_call.1']
    #allocation4 [shape = 's32[1]{0}', space=sflag, size = 0x4, scoped, tag = 'scoped memory for tpu_custom_call.1']
    #allocation5 [shape = 'u8[49152]{0}', space=vmem, size = 0xc000, scoped, tag = 'input window, operand 1, single buffered']
    #allocation6 [shape = 'u8[49152]{0}', space=vmem, size = 0xc000, scoped, tag = 'input window, operand 2, single buffered']
    #allocation7 [shape = 's32[1]{0}', space=sflag, size = 0x4, scoped, tag = 'scoped memory for tpu_custom_call.1']
    %8 = vsyncpa [#allocation4], 0
    %9 = vsyncpa [#allocation3], 0
    %10 = vsyncpa [#allocation7], 0
    // Predicated region
    $region2: #{tpu_custom_call.1} parent=1 // pred_check
      _
    $region3: #{tpu_custom_call.1} parent=1 // pred_check_branch
      %12 = sbr.rel (0) target = $region5
    $region4: #{tpu_custom_call.1} parent=1 // pred_region
      %s14 = ssub.s32 128, 128
      %15 = vsyncadd [#allocation4], %s14
      %s17 = sshll.u32 %s0, 4
      %s18 = int_to_ptr.vmem [resolvable:$true] %s17
      %20 = dma.vmem_to_smem %s18, 128, [#allocation2], [#allocation4]
    $region5: #{tpu_custom_call.1} parent=1 // pred_fallthru
      _
    // Predicated region
    $region6: #{tpu_custom_call.1} parent=1 // pred_check
      _
    $region7: #{tpu_custom_call.1} parent=1 // pred_check_branch
      %22 = sbr.rel (0) target = $region9
    $region8: #{tpu_custom_call.1} parent=1 // pred_region
      %s24 = ssub.s32 1536, 1536
      %25 = vsyncadd [#allocation3], %s24
      %s26 = sshll.u32 [#allocation5], 4
      %s27 = int_to_ptr.vmem [resolvable:$true] %s26
      %32 = dma.hbm_to_vmem [thread:$0]  %s1, 1536, %s27, [#allocation3], 128, 128, 8
    $region9: #{tpu_custom_call.1} parent=1 // pred_fallthru
      _
    // Predicated region
    $region10: #{tpu_custom_call.1} parent=1 // pred_check
      _
    $region11: #{tpu_custom_call.1} parent=1 // pred_check_branch
      %34 = sbr.rel (0) target = $region13
    $region12: #{tpu_custom_call.1} parent=1 // pred_region
      %s36 = ssub.s32 1536, 1536
      %37 = vsyncadd [#allocation7], %s36
      %s38 = sshll.u32 [#allocation6], 4
      %s39 = int_to_ptr.vmem [resolvable:$true] %s38
      %44 = dma.hbm_to_vmem [thread:$0]  %s2, 1536, %s39, [#allocation7], 128, 128, 8
    $region13: #{tpu_custom_call.1} parent=1 // pred_fallthru
      _
    // Predicated region
    $region14: #{tpu_custom_call.1} parent=1 // pred_check
      _
    $region15: #{tpu_custom_call.1} parent=1 // pred_check_branch
      %46 = sbr.rel (0) target = $region17
    $region16: #{tpu_custom_call.1} parent=1 // pred_region
      %47 = dma.done [#allocation4], 128
    $region17: #{tpu_custom_call.1} parent=1 // pred_fallthru
      _
    // Predicated region
    $region18: #{tpu_custom_call.1} parent=1 // pred_check
      _
    $region19: #{tpu_custom_call.1} parent=1 // pred_check_branch
      %49 = sbr.rel (0) target = $region21
    $region20: #{tpu_custom_call.1} parent=1 // pred_region
      %50 = dma.done [#allocation3], 1536
    $region21: #{tpu_custom_call.1} parent=1 // pred_fallthru
      _
    // Predicated region
    $region22: #{tpu_custom_call.1} parent=1 // pred_check
      _
    $region23: #{tpu_custom_call.1} parent=1 // pred_check_branch
      %52 = sbr.rel (0) target = $region25
    $region24: #{tpu_custom_call.1} parent=1 // pred_region
      %53 = dma.done [#allocation7], 1536
    $region25: #{tpu_custom_call.1} parent=1 // pred_fallthru
      _
    %54 = sfence
    %v55 = vld [vmem:[#allocation5] sm:$0xff]
    %v56 = vld [vmem:[#allocation5 + $0x8] sm:$0xff]
    %v57 = vld [vmem:[#allocation5 + $0x10] sm:$0xff]
    %v58 = vld [vmem:[#allocation5 + $0x18] sm:$0xff]
    %v59 = vld [vmem:[#allocation5 + $0x20] sm:$0xff]
    %v60 = vld [vmem:[#allocation5 + $0x28] sm:$0xff]
    %v61 = vld [vmem:[#allocation5 + $0x30] sm:$0xff]
    %v62 = vld [vmem:[#allocation5 + $0x38] sm:$0xff]
    %v63 = vld [vmem:[#allocation5 + $0x40] sm:$0xff]
    %v64 = vld [vmem:[#allocation5 + $0x48] sm:$0xff]
    %v65 = vld [vmem:[#allocation5 + $0x50] sm:$0xff]
    %v66 = vld [vmem:[#allocation5 + $0x58] sm:$0xff]
    %v67 = vld [vmem:[#allocation6] sm:$0xff]
    %v68 = vld [vmem:[#allocation6 + $0x8] sm:$0xff]
    %v69 = vld [vmem:[#allocation6 + $0x10] sm:$0xff]
    %v70 = vld [vmem:[#allocation6 + $0x18] sm:$0xff]
    %v71 = vld [vmem:[#allocation6 + $0x20] sm:$0xff]
    %v72 = vld [vmem:[#allocation6 + $0x28] sm:$0xff]
    %v73 = vld [vmem:[#allocation6 + $0x30] sm:$0xff]
    %v74 = vld [vmem:[#allocation6 + $0x38] sm:$0xff]
    %v75 = vld [vmem:[#allocation6 + $0x40] sm:$0xff]
    %v76 = vld [vmem:[#allocation6 + $0x48] sm:$0xff]
    %v77 = vld [vmem:[#allocation6 + $0x50] sm:$0xff]
    %v78 = vld [vmem:[#allocation6 + $0x58] sm:$0xff]
    %v79 = vsub.f32 %v55, %v67
    %v80 = vsub.f32 %v56, %v68
    %v81 = vsub.f32 %v57, %v69
    %v82 = vsub.f32 %v58, %v70
    %v83 = vsub.f32 %v59, %v71
    %v84 = vsub.f32 %v60, %v72
    %v85 = vsub.f32 %v61, %v73
    %v86 = vsub.f32 %v62, %v74
    %v87 = vsub.f32 %v63, %v75
    %v88 = vsub.f32 %v64, %v76
    %v89 = vsub.f32 %v65, %v77
    %v90 = vsub.f32 %v66, %v78
    %vm91 = vcmask 146432
    %92 = vst.msk [vmem:[%s3] sm:$0xff] %vm91, 0.0
    %93 = vst.msk [vmem:[%s3 + $0x8] sm:$0xff] %vm91, 0.0
    %vm94 = vcmask 140288
    %95 = vst.msk [vmem:[%s3 + $0x10] sm:$0x3] %vm94, 0.0
    %96 = vst.msk [vmem:[%s3 + $0x18] sm:$0xff] %vm91, 0.0
    %97 = vst.msk [vmem:[%s3 + $0x20] sm:$0xff] %vm91, 0.0
    %98 = vst.msk [vmem:[%s3 + $0x28] sm:$0x3] %vm94, 0.0
    %99 = vst.msk [vmem:[%s3 + $0x30] sm:$0xff] %vm91, 0.0
    %100 = vst.msk [vmem:[%s3 + $0x38] sm:$0xff] %vm91, 0.0
    %101 = vst.msk [vmem:[%s3 + $0x40] sm:$0x3] %vm94, 0.0
    %102 = vst.msk [vmem:[%s3 + $0x48] sm:$0xff] %vm91, 0.0
    %103 = vst.msk [vmem:[%s3 + $0x50] sm:$0xff] %vm91, 0.0
    %104 = vst.msk [vmem:[%s3 + $0x58] sm:$0x3] %vm94, 0.0
    %105 = vst.msk [vmem:[%s3 + $0x60] sm:$0xff] %vm91, 0.0
    %106 = vst.msk [vmem:[%s3 + $0x68] sm:$0xff] %vm91, 0.0
    %107 = vst.msk [vmem:[%s3 + $0x70] sm:$0x3] %vm94, 0.0
    %108 = vst.msk [vmem:[%s3 + $0x78] sm:$0xff] %vm91, 0.0
    %109 = vst.msk [vmem:[%s3 + $0x80] sm:$0xff] %vm91, 0.0
    %110 = vst.msk [vmem:[%s3 + $0x88] sm:$0x3] %vm94, 0.0
    %111 = vst.msk [vmem:[%s3 + $0x90] sm:$0xff] %vm91, 0.0
    %112 = vst.msk [vmem:[%s3 + $0x98] sm:$0xff] %vm91, 0.0
    %113 = vst.msk [vmem:[%s3 + $0xa0] sm:$0x3] %vm94, 0.0
    %114 = vst.msk [vmem:[%s3 + $0xa8] sm:$0xff] %vm91, 0.0
    %115 = vst.msk [vmem:[%s3 + $0xb0] sm:$0xff] %vm91, 0.0
    %116 = vst.msk [vmem:[%s3 + $0xb8] sm:$0x3] %vm94, 0.0
    %117 = vst.msk [vmem:[%s3 + $0xc0] sm:$0xff] %vm91, 0.0
    %118 = vst.msk [vmem:[%s3 + $0xc8] sm:$0xff] %vm91, 0.0
    %119 = vst.msk [vmem:[%s3 + $0xd0] sm:$0x3] %vm94, 0.0
    %120 = vst.msk [vmem:[%s3 + $0xd8] sm:$0xff] %vm91, 0.0
    %121 = vst.msk [vmem:[%s3 + $0xe0] sm:$0xff] %vm91, 0.0
    %122 = vst.msk [vmem:[%s3 + $0xe8] sm:$0x3] %vm94, 0.0
    %123 = vst.msk [vmem:[%s3 + $0xf0] sm:$0xff] %vm91, 0.0
    %124 = vst.msk [vmem:[%s3 + $0xf8] sm:$0xff] %vm91, 0.0
    %125 = vst.msk [vmem:[%s3 + $0x100] sm:$0x3] %vm94, 0.0
    %126 = vst.msk [vmem:[%s3 + $0x108] sm:$0xff] %vm91, 0.0
    %127 = vst.msk [vmem:[%s3 + $0x110] sm:$0xff] %vm91, 0.0
    %128 = vst.msk [vmem:[%s3 + $0x118] sm:$0x3] %vm94, 0.0
    %129 = vst.msk [vmem:[%s3 + $0x120] sm:$0xff] %vm91, 0.0
    %130 = vst.msk [vmem:[%s3 + $0x128] sm:$0xff] %vm91, 0.0
    %131 = vst.msk [vmem:[%s3 + $0x130] sm:$0x3] %vm94, 0.0
    %132 = vst.msk [vmem:[%s3 + $0x138] sm:$0xff] %vm91, 0.0
    %133 = vst.msk [vmem:[%s3 + $0x140] sm:$0xff] %vm91, 0.0
    %134 = vst.msk [vmem:[%s3 + $0x148] sm:$0x3] %vm94, 0.0
    %135 = vst.msk [vmem:[%s3 + $0x150] sm:$0xff] %vm91, 0.0
    %136 = vst.msk [vmem:[%s3 + $0x158] sm:$0xff] %vm91, 0.0
    %137 = vst.msk [vmem:[%s3 + $0x160] sm:$0x3] %vm94, 0.0
    %138 = vst.msk [vmem:[%s3 + $0x168] sm:$0xff] %vm91, 0.0
    %139 = vst.msk [vmem:[%s3 + $0x170] sm:$0xff] %vm91, 0.0
    %140 = vst.msk [vmem:[%s3 + $0x178] sm:$0x3] %vm94, 0.0
    %s141 = sld [smem:[#allocation2]]
    %v142 = vstv %s141
    %v143 = vmul.f32 %v142, %v79
    %v144 = vmul.f32 %v142, %v80
    %v145 = vmul.f32 %v142, %v85
    %v146 = vmul.f32 %v142, %v86
    %s147 = sld [smem:[#allocation2 + $0x1]]
    %v148 = vstv %s147
    %v149 = vmul.f32 %v148, %v81
    %v150 = vmul.f32 %v148, %v82
    %v151 = vmul.f32 %v148, %v87
    %v152 = vmul.f32 %v148, %v88
    %v153 = vadd.f32 %v143, %v149
    %v154 = vadd.f32 %v144, %v150
    %v155 = vadd.f32 %v145, %v151
    %v156 = vadd.f32 %v146, %v152
    %s157 = sld [smem:[#allocation2 + $0x2]]
    %v158 = vstv %s157
    %v159 = vmul.f32 %v158, %v83
    %v160 = vmul.f32 %v158, %v84
    %v161 = vmul.f32 %v158, %v89
    %v162 = vmul.f32 %v158, %v90
    %v163 = vadd.f32 %v153, %v159
    %v164 = vadd.f32 %v154, %v160
    %v165 = vadd.f32 %v155, %v161
    %v166 = vadd.f32 %v156, %v162
    %171 = vrot.lane.b32.xlu0 %v163, 1
    %v172 = vpop.permute.xlu0 %171
    %173 = vrot.lane.b32.xlu0 %v164, 1
    %v174 = vpop.permute.xlu0 %173
    %175 = vrot.lane.b32.xlu0 %v165, 1
    %v176 = vpop.permute.xlu0 %175
    %177 = vrot.lane.b32.xlu0 %v166, 1
    %v178 = vpop.permute.xlu0 %177
    %vm183 = vcmask 138248
    %184 = vst.msk [vmem:[%s3 + $0x1] sm:$0xff] %vm183, %v172
    %185 = vst.msk [vmem:[%s3 + $0x9] sm:$0xff] %vm183, %v174
    %186 = vst.msk [vmem:[%s3 + $0xc1] sm:$0xff] %vm183, %v176
    %187 = vst.msk [vmem:[%s3 + $0xc9] sm:$0xff] %vm183, %v178
    %s188 = sld [smem:[#allocation2 + $0x80]]
    %v189 = vstv %s188
    %v190 = vmul.f32 %v189, %v79
    %v191 = vmul.f32 %v189, %v80
    %v192 = vmul.f32 %v189, %v85
    %v193 = vmul.f32 %v189, %v86
    %s194 = sld [smem:[#allocation2 + $0x81]]
    %v195 = vstv %s194
    %v196 = vmul.f32 %v195, %v81
    %v197 = vmul.f32 %v195, %v82
    %v198 = vmul.f32 %v195, %v87
    %v199 = vmul.f32 %v195, %v88
    %v200 = vadd.f32 %v190, %v196
    %v201 = vadd.f32 %v191, %v197
    %v202 = vadd.f32 %v192, %v198
    %v203 = vadd.f32 %v193, %v199
    %s204 = sld [smem:[#allocation2 + $0x82]]
    %v205 = vstv %s204
    %v206 = vmul.f32 %v205, %v83
    %v207 = vmul.f32 %v205, %v84
    %v208 = vmul.f32 %v205, %v89
    %v209 = vmul.f32 %v205, %v90
    %v210 = vadd.f32 %v200, %v206
    %v211 = vadd.f32 %v201, %v207
    %v212 = vadd.f32 %v202, %v208
    %v213 = vadd.f32 %v203, %v209
    %218 = vrot.lane.b32.xlu0 %v210, 1
    %v219 = vpop.permute.xlu0 %218
    %220 = vrot.lane.b32.xlu0 %v211, 1
    %v221 = vpop.permute.xlu0 %220
    %222 = vrot.lane.b32.xlu0 %v212, 1
    %v223 = vpop.permute.xlu0 %222
    %224 = vrot.lane.b32.xlu0 %v213, 1
    %v225 = vpop.permute.xlu0 %224
    %s230 = scalar_lea.vmem %s3, 24
    %231 = vst.msk [vmem:[%s230 + $0x1] sm:$0xff] %vm183, %v219
    %232 = vst.msk [vmem:[%s230 + $0x9] sm:$0xff] %vm183, %v221
    %233 = vst.msk [vmem:[%s230 + $0xc1] sm:$0xff] %vm183, %v223
    %234 = vst.msk [vmem:[%s230 + $0xc9] sm:$0xff] %vm183, %v225
    %s235 = sld [smem:[#allocation2 + $0x100]]
    %v236 = vstv %s235
    %v237 = vmul.f32 %v236, %v79
    %v238 = vmul.f32 %v236, %v80
    %v239 = vmul.f32 %v236, %v85
    %v240 = vmul.f32 %v236, %v86
    %s241 = sld [smem:[#allocation2 + $0x101]]
    %v242 = vstv %s241
    %v243 = vmul.f32 %v242, %v81
    %v244 = vmul.f32 %v242, %v82
    %v245 = vmul.f32 %v242, %v87
    %v246 = vmul.f32 %v242, %v88
    %v247 = vadd.f32 %v237, %v243
    %v248 = vadd.f32 %v238, %v244
    %v249 = vadd.f32 %v239, %v245
    %v250 = vadd.f32 %v240, %v246
    %s251 = sld [smem:[#allocation2 + $0x102]]
    %v252 = vstv %s251
    %v253 = vmul.f32 %v252, %v83
    %v254 = vmul.f32 %v252, %v84
    %v255 = vmul.f32 %v252, %v89
    %v256 = vmul.f32 %v252, %v90
    %v257 = vadd.f32 %v247, %v253
    %v258 = vadd.f32 %v248, %v254
    %v259 = vadd.f32 %v249, %v255
    %v260 = vadd.f32 %v250, %v256
    %265 = vrot.lane.b32.xlu0 %v257, 1
    %v266 = vpop.permute.xlu0 %265
    %267 = vrot.lane.b32.xlu0 %v258, 1
    %v268 = vpop.permute.xlu0 %267
    %269 = vrot.lane.b32.xlu0 %v259, 1
    %v270 = vpop.permute.xlu0 %269
    %271 = vrot.lane.b32.xlu0 %v260, 1
    %v272 = vpop.permute.xlu0 %271
    %s277 = scalar_lea.vmem %s3, 48
    %278 = vst.msk [vmem:[%s277 + $0x1] sm:$0xff] %vm183, %v266
    %279 = vst.msk [vmem:[%s277 + $0x9] sm:$0xff] %vm183, %v268
    %280 = vst.msk [vmem:[%s277 + $0xc1] sm:$0xff] %vm183, %v270
    %281 = vst.msk [vmem:[%s277 + $0xc9] sm:$0xff] %vm183, %v272
    %s282 = sld [smem:[#allocation2 + $0x180]]
    %v283 = vstv %s282
    %v284 = vmul.f32 %v283, %v79
    %v285 = vmul.f32 %v283, %v80
    %v286 = vmul.f32 %v283, %v85
    %v287 = vmul.f32 %v283, %v86
    %s288 = sld [smem:[#allocation2 + $0x181]]
    %v289 = vstv %s288
    %v290 = vmul.f32 %v289, %v81
    %v291 = vmul.f32 %v289, %v82
    %v292 = vmul.f32 %v289, %v87
    %v293 = vmul.f32 %v289, %v88
    %v294 = vadd.f32 %v284, %v290
    %v295 = vadd.f32 %v285, %v291
    %v296 = vadd.f32 %v286, %v292
    %v297 = vadd.f32 %v287, %v293
    %s298 = sld [smem:[#allocation2 + $0x182]]
    %v299 = vstv %s298
    %v300 = vmul.f32 %v299, %v83
    %v301 = vmul.f32 %v299, %v84
    %v302 = vmul.f32 %v299, %v89
    %v303 = vmul.f32 %v299, %v90
    %v304 = vadd.f32 %v294, %v300
    %v305 = vadd.f32 %v295, %v301
    %v306 = vadd.f32 %v296, %v302
    %v307 = vadd.f32 %v297, %v303
    %312 = vrot.lane.b32.xlu0 %v304, 1
    %v313 = vpop.permute.xlu0 %312
    %314 = vrot.lane.b32.xlu0 %v305, 1
    %v315 = vpop.permute.xlu0 %314
    %316 = vrot.lane.b32.xlu0 %v306, 1
    %v317 = vpop.permute.xlu0 %316
    %318 = vrot.lane.b32.xlu0 %v307, 1
    %v319 = vpop.permute.xlu0 %318
    %s324 = scalar_lea.vmem %s3, 72
    %325 = vst.msk [vmem:[%s324 + $0x1] sm:$0xff] %vm183, %v313
    %326 = vst.msk [vmem:[%s324 + $0x9] sm:$0xff] %vm183, %v315
    %327 = vst.msk [vmem:[%s324 + $0xc1] sm:$0xff] %vm183, %v317
    %328 = vst.msk [vmem:[%s324 + $0xc9] sm:$0xff] %vm183, %v319
    %s329 = sld [smem:[#allocation2 + $0x200]]
    %v330 = vstv %s329
    %v331 = vmul.f32 %v330, %v79
    %v332 = vmul.f32 %v330, %v80
    %v333 = vmul.f32 %v330, %v85
    %v334 = vmul.f32 %v330, %v86
    %s335 = sld [smem:[#allocation2 + $0x201]]
    %v336 = vstv %s335
    %v337 = vmul.f32 %v336, %v81
    %v338 = vmul.f32 %v336, %v82
    %v339 = vmul.f32 %v336, %v87
    %v340 = vmul.f32 %v336, %v88
    %v341 = vadd.f32 %v331, %v337
    %v342 = vadd.f32 %v332, %v338
    %v343 = vadd.f32 %v333, %v339
    %v344 = vadd.f32 %v334, %v340
    %s345 = sld [smem:[#allocation2 + $0x202]]
    %v346 = vstv %s345
    %v347 = vmul.f32 %v346, %v83
    %v348 = vmul.f32 %v346, %v84
    %v349 = vmul.f32 %v346, %v89
    %v350 = vmul.f32 %v346, %v90
    %v351 = vadd.f32 %v341, %v347
    %v352 = vadd.f32 %v342, %v348
    %v353 = vadd.f32 %v343, %v349
    %v354 = vadd.f32 %v344, %v350
    %359 = vrot.lane.b32.xlu0 %v351, 1
    %v360 = vpop.permute.xlu0 %359
    %361 = vrot.lane.b32.xlu0 %v352, 1
    %v362 = vpop.permute.xlu0 %361
    %363 = vrot.lane.b32.xlu0 %v353, 1
    %v364 = vpop.permute.xlu0 %363
    %365 = vrot.lane.b32.xlu0 %v354, 1
    %v366 = vpop.permute.xlu0 %365
    %s371 = scalar_lea.vmem %s3, 96
    %372 = vst.msk [vmem:[%s371 + $0x1] sm:$0xff] %vm183, %v360
    %373 = vst.msk [vmem:[%s371 + $0x9] sm:$0xff] %vm183, %v362
    %374 = vst.msk [vmem:[%s371 + $0xc1] sm:$0xff] %vm183, %v364
    %375 = vst.msk [vmem:[%s371 + $0xc9] sm:$0xff] %vm183, %v366
    %s376 = sld [smem:[#allocation2 + $0x280]]
    %v377 = vstv %s376
    %v378 = vmul.f32 %v377, %v79
    %v379 = vmul.f32 %v377, %v80
    %v380 = vmul.f32 %v377, %v85
    %v381 = vmul.f32 %v377, %v86
    %s382 = sld [smem:[#allocation2 + $0x281]]
    %v383 = vstv %s382
    %v384 = vmul.f32 %v383, %v81
    %v385 = vmul.f32 %v383, %v82
    %v386 = vmul.f32 %v383, %v87
    %v387 = vmul.f32 %v383, %v88
    %v388 = vadd.f32 %v378, %v384
    %v389 = vadd.f32 %v379, %v385
    %v390 = vadd.f32 %v380, %v386
    %v391 = vadd.f32 %v381, %v387
    %s392 = sld [smem:[#allocation2 + $0x282]]
    %v393 = vstv %s392
    %v394 = vmul.f32 %v393, %v83
    %v395 = vmul.f32 %v393, %v84
    %v396 = vmul.f32 %v393, %v89
    %v397 = vmul.f32 %v393, %v90
    %v398 = vadd.f32 %v388, %v394
    %v399 = vadd.f32 %v389, %v395
    %v400 = vadd.f32 %v390, %v396
    %v401 = vadd.f32 %v391, %v397
    %406 = vrot.lane.b32.xlu0 %v398, 1
    %v407 = vpop.permute.xlu0 %406
    %408 = vrot.lane.b32.xlu0 %v399, 1
    %v409 = vpop.permute.xlu0 %408
    %410 = vrot.lane.b32.xlu0 %v400, 1
    %v411 = vpop.permute.xlu0 %410
    %412 = vrot.lane.b32.xlu0 %v401, 1
    %v413 = vpop.permute.xlu0 %412
    %s418 = scalar_lea.vmem %s3, 120
    %419 = vst.msk [vmem:[%s418 + $0x1] sm:$0xff] %vm183, %v407
    %420 = vst.msk [vmem:[%s418 + $0x9] sm:$0xff] %vm183, %v409
    %421 = vst.msk [vmem:[%s418 + $0xc1] sm:$0xff] %vm183, %v411
    %422 = vst.msk [vmem:[%s418 + $0xc9] sm:$0xff] %vm183, %v413
    %s423 = sld [smem:[#allocation2 + $0x300]]
    %v424 = vstv %s423
    %v425 = vmul.f32 %v424, %v79
    %v426 = vmul.f32 %v424, %v80
    %v427 = vmul.f32 %v424, %v85
    %v428 = vmul.f32 %v424, %v86
    %s429 = sld [smem:[#allocation2 + $0x301]]
    %v430 = vstv %s429
    %v431 = vmul.f32 %v430, %v81
    %v432 = vmul.f32 %v430, %v82
    %v433 = vmul.f32 %v430, %v87
    %v434 = vmul.f32 %v430, %v88
    %v435 = vadd.f32 %v425, %v431
    %v436 = vadd.f32 %v426, %v432
    %v437 = vadd.f32 %v427, %v433
    %v438 = vadd.f32 %v428, %v434
    %s439 = sld [smem:[#allocation2 + $0x302]]
    %v440 = vstv %s439
    %v441 = vmul.f32 %v440, %v83
    %v442 = vmul.f32 %v440, %v84
    %v443 = vmul.f32 %v440, %v89
    %v444 = vmul.f32 %v440, %v90
    %v445 = vadd.f32 %v435, %v441
    %v446 = vadd.f32 %v436, %v442
    %v447 = vadd.f32 %v437, %v443
    %v448 = vadd.f32 %v438, %v444
    %453 = vrot.lane.b32.xlu0 %v445, 1
    %v454 = vpop.permute.xlu0 %453
    %455 = vrot.lane.b32.xlu0 %v446, 1
    %v456 = vpop.permute.xlu0 %455
    %457 = vrot.lane.b32.xlu0 %v447, 1
    %v458 = vpop.permute.xlu0 %457
    %459 = vrot.lane.b32.xlu0 %v448, 1
    %v460 = vpop.permute.xlu0 %459
    %s465 = scalar_lea.vmem %s3, 144
    %466 = vst.msk [vmem:[%s465 + $0x1] sm:$0xff] %vm183, %v454
    %467 = vst.msk [vmem:[%s465 + $0x9] sm:$0xff] %vm183, %v456
    %468 = vst.msk [vmem:[%s465 + $0xc1] sm:$0xff] %vm183, %v458
    %469 = vst.msk [vmem:[%s465 + $0xc9] sm:$0xff] %vm183, %v460
    %s470 = sld [smem:[#allocation2 + $0x380]]
    %v471 = vstv %s470
    %v472 = vmul.f32 %v471, %v79
    %v473 = vmul.f32 %v471, %v80
    %v474 = vmul.f32 %v471, %v85
    %v475 = vmul.f32 %v471, %v86
    %s476 = sld [smem:[#allocation2 + $0x381]]
    %v477 = vstv %s476
    %v478 = vmul.f32 %v477, %v81
    %v479 = vmul.f32 %v477, %v82
    %v480 = vmul.f32 %v477, %v87
    %v481 = vmul.f32 %v477, %v88
    %v482 = vadd.f32 %v472, %v478
    %v483 = vadd.f32 %v473, %v479
    %v484 = vadd.f32 %v474, %v480
    %v485 = vadd.f32 %v475, %v481
    %s486 = sld [smem:[#allocation2 + $0x382]]
    %v487 = vstv %s486
    %v488 = vmul.f32 %v487, %v83
    %v489 = vmul.f32 %v487, %v84
    %v490 = vmul.f32 %v487, %v89
    %v491 = vmul.f32 %v487, %v90
    %v492 = vadd.f32 %v482, %v488
    %v493 = vadd.f32 %v483, %v489
    %v494 = vadd.f32 %v484, %v490
    %v495 = vadd.f32 %v485, %v491
    %500 = vrot.lane.b32.xlu0 %v492, 1
    %v501 = vpop.permute.xlu0 %500
    %502 = vrot.lane.b32.xlu0 %v493, 1
    %v503 = vpop.permute.xlu0 %502
    %504 = vrot.lane.b32.xlu0 %v494, 1
    %v505 = vpop.permute.xlu0 %504
    %506 = vrot.lane.b32.xlu0 %v495, 1
    %v507 = vpop.permute.xlu0 %506
    %s512 = scalar_lea.vmem %s3, 168
    %513 = vst.msk [vmem:[%s512 + $0x1] sm:$0xff] %vm183, %v501
    %514 = vst.msk [vmem:[%s512 + $0x9] sm:$0xff] %vm183, %v503
    %515 = vst.msk [vmem:[%s512 + $0xc1] sm:$0xff] %vm183, %v505
    %516 = vst.msk [vmem:[%s512 + $0xc9] sm:$0xff] %vm183, %v507
    // Predicated region
    $region26: #{tpu_custom_call.1} parent=1 // pred_check
      _
    $region27: #{tpu_custom_call.1} parent=1 // pred_check_branch
      %518 = sbr.rel (0) target = $region29
    $region28: #{tpu_custom_call.1} parent=1 // pred_region
      _
    $region29: #{tpu_custom_call.1} parent=1 // pred_fallthru
      _
    // Predicated region
    $region30: #{tpu_custom_call.1} parent=1 // pred_check
      _
    $region31: #{tpu_custom_call.1} parent=1 // pred_check_branch
      %520 = sbr.rel (0) target = $region33
    $region32: #{tpu_custom_call.1} parent=1 // pred_region
      _
    $region33: #{tpu_custom_call.1} parent=1 // pred_fallthru
      _
    %521 = vsyncpa [#allocation3], 1
    %522 = vsyncpa [#allocation7], 1
    %523 = vsyncpa [#allocation4], 1

</llo_original>
